<compile_context>
chip_gen: v7x
topology: tpu7x:2x2x1
jax: 0.10.0
libtpu: 0.0.40
codegen_flags: <defaults>
</compile_context>

<pallas_src>
import jax
import jax.numpy as jnp
from jax.experimental import pallas as pl
from jax.experimental.pallas import tpu as pltpu


def _splitting_kernel(x_ref, even_ref, odd_ref):
    # x_ref:    (rt, 2*D) VMEM tile (rt rows of the (B*T//2, 2*D) view)
    # even_ref: (rt, D)   <- first D lanes of each row  == x[:, ::2, :]
    # odd_ref:  (rt, D)   <- last  D lanes of each row  == x[:, 1::2, :]
    D = even_ref.shape[-1]
    even_ref[...] = x_ref[:, :D]
    odd_ref[...] = x_ref[:, D:]


def splitting(x, *, max_block_bytes=4 * 1024 * 1024, min_grid_steps=8):
    """Pallas equivalent of Splitting.forward: (x[:, ::2, :], x[:, 1::2, :])."""
    B, T, D = x.shape
    assert T % 2 == 0, "sequence length must be even for an exact even/odd split"
    Th = T // 2
    R = B * Th

    # Metadata-only reshape: adjacent (even, odd) T-rows become one row of
    # width 2*D, so the split is a contiguous lane slice.
    x2 = x.reshape(R, 2 * D)

    itemsize = jnp.dtype(x.dtype).itemsize
    row_bytes = 2 * D * itemsize

    # Packed-sublane alignment: 8 rows (f32), 16 (bf16), 32 (int8/fp8).
    sub = max(8, 8 * (4 // itemsize))

    # Largest aligned row tile under the VMEM budget.  Double-buffered
    # footprint ~= 4x the input block (input + 2 half-width outputs, x2 bufs).
    rt = max(sub, (max_block_bytes // row_bytes) // sub * sub)

    # Keep at least ~min_grid_steps grid steps when R allows it: overlaps DMA
    # with writeback and lets the v7x two-TensorCore chip split the work.
    if R > min_grid_steps * sub:
        rt = min(rt, pl.cdiv(pl.cdiv(R, min_grid_steps), sub) * sub)

    if rt >= R:
        # Tiny input: a single full-extent block is legal for any R (no 8-row
        # divisibility requirement) and there is nothing to pipeline anyway.
        rt = R
    grid = (pl.cdiv(R, rt),)  # ragged final block is handled by the pipeline

    block_bytes = rt * row_bytes
    vmem_limit = int(min(64 << 20, max(32 << 20, 5 * block_bytes)))

    even2, odd2 = pl.pallas_call(
        _splitting_kernel,
        out_shape=(
            jax.ShapeDtypeStruct((R, D), x.dtype),
            jax.ShapeDtypeStruct((R, D), x.dtype),
        ),
        grid=grid,
        # TODO(synk): if a very small D ever exposes read-DMA issue latency,
        # sweep pipeline_mode=pl.Buffered(3) on this input spec.
        in_specs=[pl.BlockSpec((rt, 2 * D), lambda r: (r, 0))],
        out_specs=(
            pl.BlockSpec((rt, D), lambda r: (r, 0)),
            pl.BlockSpec((rt, D), lambda r: (r, 0)),
        ),
        compiler_params=pltpu.CompilerParams(
            dimension_semantics=("parallel",),
            vmem_limit_bytes=vmem_limit,
        ),
        cost_estimate=pl.CostEstimate(
            flops=0,
            transcendentals=0,
            bytes_accessed=2 * B * T * D * itemsize,  # one HBM read + one write
        ),
    )(x2)

    # TODO(synk): when D % 128 != 0 the odd lane-slice needs an in-vreg lane
    # shift and the (rt, D) output stores are masked; a fully lane-dense
    # variant would change the output layout (or, better, the split should be
    # fused into the consumer kernel, where even/odd are free lane slices of a
    # VMEM-resident tile).
    return even2.reshape(B, Th, D), odd2.reshape(B, Th, D)


if __name__ == "__main__":
    key = jax.random.PRNGKey(0)

    # Primary small case (module has no params): batch=2, seq=8, hidden=32.
    B, T, D = 2, 8, 32
    x = jax.random.normal(key, (B, T, D), dtype=jnp.float32)
    even, odd = splitting(x)
    jax.block_until_ready(even)
    jax.block_until_ready(odd)
    assert even.shape == (B, T // 2, D) and odd.shape == (B, T // 2, D)
    assert even.dtype == x.dtype and odd.dtype == x.dtype
    assert jnp.array_equal(even, x[:, ::2, :])
    assert jnp.array_equal(odd, x[:, 1::2, :])

    # Awkward-shape case: exercises the cdiv grid with a ragged final block
    # (B*T//2 = 65 rows, 16-row tiles) and a non-multiple-of-128 hidden size.
    B2, T2, D2 = 5, 26, 16
    xa = jax.random.normal(jax.random.PRNGKey(1), (B2, T2, D2), dtype=jnp.float32)
    even_a, odd_a = splitting(xa)
    jax.block_until_ready(even_a)
    jax.block_until_ready(odd_a)
    assert jnp.array_equal(even_a, xa[:, ::2, :])
    assert jnp.array_equal(odd_a, xa[:, 1::2, :])

    print("KERNEL_OK")
</pallas_src>

<mosaic_0001>
module attributes {stable_mosaic.version = 11 : i64} {
  func.func @_splitting_kernel(%arg0: i32, %arg1: memref<8x64xf32, #tpu.memory_space<vmem>>, %arg2: memref<8x32xf32, #tpu.memory_space<vmem>>, %arg3: memref<8x32xf32, #tpu.memory_space<vmem>>) attributes {dimension_semantics = [#tpu.dimension_semantics<parallel>], iteration_bounds = array<i64: 1>, scalar_prefetch = 0 : i64, scratch_operands = 0 : i64, tpu.core_type = #tpu.core_type<tc>, window_params = [{transform_indices = @transform_0, window_bounds = array<i64: 8, 64>}, {transform_indices = @transform_1, window_bounds = array<i64: 8, 32>}, {transform_indices = @transform_2, window_bounds = array<i64: 8, 32>}]} {
    %c0 = arith.constant 0 : index
    %c0_0 = arith.constant 0 : index
    %0 = vector.load %arg1[%c0, %c0_0] : memref<8x64xf32, #tpu.memory_space<vmem>>, vector<8x32xf32>
    %c0_1 = arith.constant 0 : index
    %c0_2 = arith.constant 0 : index
    %1 = vector.load %arg2[%c0_1, %c0_2] : memref<8x32xf32, #tpu.memory_space<vmem>>, vector<8x32xf32>
    tpu.vector_store %arg2[%c0_1, %c0_2], %0 {strides = array<i32>} : memref<8x32xf32, #tpu.memory_space<vmem>>, vector<8x32xf32>,
    %c0_3 = arith.constant 0 : index
    %c32 = arith.constant 32 : index
    %2 = vector.load %arg1[%c0_3, %c32] : memref<8x64xf32, #tpu.memory_space<vmem>>, vector<8x32xf32>
    %c0_4 = arith.constant 0 : index
    %c0_5 = arith.constant 0 : index
    %3 = vector.load %arg3[%c0_4, %c0_5] : memref<8x32xf32, #tpu.memory_space<vmem>>, vector<8x32xf32>
    tpu.vector_store %arg3[%c0_4, %c0_5], %2 {strides = array<i32>} : memref<8x32xf32, #tpu.memory_space<vmem>>, vector<8x32xf32>,
    return
  }
  func.func @transform_0(%arg0: i32) -> (i32, i32) {
    %c0_i32 = arith.constant 0 : i32
    %c0_i32_0 = arith.constant 0 : i32
    return %arg0, %c0_i32 : i32, i32
  }
  func.func @transform_1(%arg0: i32) -> (i32, i32) {
    %c0_i32 = arith.constant 0 : i32
    %c0_i32_0 = arith.constant 0 : i32
    return %arg0, %c0_i32 : i32, i32
  }
  func.func @transform_2(%arg0: i32) -> (i32, i32) {
    %c0_i32 = arith.constant 0 : i32
    %c0_i32_0 = arith.constant 0 : i32
    return %arg0, %c0_i32 : i32, i32
  }
}

</mosaic_0001>

<llo_original>
// kernel: tpu_custom_call.1
$region0: #{tpu_custom_call.1}
  #allocation0 [shape = 'u32[]', space=smem, size = 0x4, offset = 0x4, fixed_abs, tag = 'smem constant byte address 0x4 - core index']
  #allocation1 [shape = 'u32[144,128]{1,0:T(1,128)}', space=vmem, size = 0x12000, scoped, tag = 'internal scratch']
  %s0 = inlined_call_operand.hbm [shape: f32[8,64], index: 0, kind: input, shape index: {}]
  %s1 = inlined_call_operand.hbm [shape: f32[8,32], index: 1, kind: output, shape index: {0}]
  %s2 = inlined_call_operand.hbm [shape: f32[8,32], index: 2, kind: output, shape index: {1}]
  %3 = xla_tuple %s1, %s2
  %s4 = sld [smem:[#allocation0]]
  $region26: #{tpu_custom_call.1} parent=0
    _
  %s6 = ssub.s32 1, %s4
  %s7 = scalar_select 0, %s6, %s4
  $region1: #{tpu_custom_call.1} parent=0
    #allocation2 [shape = 'u8[4096]{0}', space=vmem, size = 0x1000, scoped, tag = 'input window, operand 0, single buffered']
    #allocation3 [shape = 's32[1]{0}', space=sflag, size = 0x4, scoped, tag = 'scoped memory for tpu_custom_call.1']
    #allocation4 [shape = 's32[1]{0}', space=sflag, size = 0x4, scoped, tag = 'scoped memory for tpu_custom_call.1']
    #allocation5 [shape = 'u8[4096]{0}', space=vmem, size = 0x1000, scoped, tag = 'output window, operand 0, single buffered']
    #allocation6 [shape = 'u8[4096]{0}', space=vmem, size = 0x1000, scoped, tag = 'output window, operand 1, single buffered']
    #allocation7 [shape = 's32[1]{0}', space=sflag, size = 0x4, scoped, tag = 'scoped memory for tpu_custom_call.1']
    %8 = vsyncpa [#allocation3], 0
    %9 = vsyncpa [#allocation4], 0
    %10 = vsyncpa [#allocation7], 0
    // Predicated region
    $region2: #{tpu_custom_call.1} parent=1 // pred_check
      _
    $region3: #{tpu_custom_call.1} parent=1 // pred_check_branch
      %12 = sbr.rel (0) target = $region5
    $region4: #{tpu_custom_call.1} parent=1 // pred_region
      %s14 = ssub.s32 128, 128
      %15 = vsyncadd [#allocation3], %s14
      %s17 = sshll.u32 [#allocation2], 4
      %s18 = int_to_ptr.vmem [resolvable:$true] %s17
      %20 = dma.hbm_to_vmem [thread:$0]  %s0, 128, %s18, [#allocation3]
    $region5: #{tpu_custom_call.1} parent=1 // pred_fallthru
      _
    // Predicated region
    $region6: #{tpu_custom_call.1} parent=1 // pred_check
      _
    $region7: #{tpu_custom_call.1} parent=1 // pred_check_branch
      %22 = sbr.rel (0) target = $region9
    $region8: #{tpu_custom_call.1} parent=1 // pred_region
      %23 = dma.done [#allocation3], 128
    $region9: #{tpu_custom_call.1} parent=1 // pred_fallthru
      _
    %v24 = vld [vmem:[#allocation2] sm:$0xff]
    %vm25 = vcmask 261120
    %26 = vst.msk [vmem:[#allocation5] sm:$0xff] %vm25, %v24
    %v27 = vld [vmem:[#allocation2] sm:$0xff]
    %29 = vrot.lane.b32.xlu0 %v27, 96
    %v30 = vpop.permute.xlu0 %29
    %32 = vst.msk [vmem:[#allocation6] sm:$0xff] %vm25, %v30
    // Predicated region
    $region10: #{tpu_custom_call.1} parent=1 // pred_check
      _
    $region11: #{tpu_custom_call.1} parent=1 // pred_check_branch
      %34 = sbr.rel (0) target = $region13
    $region12: #{tpu_custom_call.1} parent=1 // pred_region
      %s36 = ssub.s32 128, 128
      %37 = vsyncadd [#allocation4], %s36
      %s39 = sshll.u32 [#allocation5], 4
      %s40 = int_to_ptr.vmem [resolvable:$true] %s39
      %42 = dma.vmem_to_hbm [thread:$0]  %s40, 128, %s1, [#allocation4]
    $region13: #{tpu_custom_call.1} parent=1 // pred_fallthru
      _
    // Predicated region
    $region14: #{tpu_custom_call.1} parent=1 // pred_check
      _
    $region15: #{tpu_custom_call.1} parent=1 // pred_check_branch
      %44 = sbr.rel (0) target = $region17
    $region16: #{tpu_custom_call.1} parent=1 // pred_region
      %s46 = ssub.s32 128, 128
      %47 = vsyncadd [#allocation7], %s46
      %s49 = sshll.u32 [#allocation6], 4
      %s50 = int_to_ptr.vmem [resolvable:$true] %s49
      %52 = dma.vmem_to_hbm [thread:$0]  %s50, 128, %s2, [#allocation7]
    $region17: #{tpu_custom_call.1} parent=1 // pred_fallthru
      _
    // Predicated region
    $region18: #{tpu_custom_call.1} parent=1 // pred_check
      _
    $region19: #{tpu_custom_call.1} parent=1 // pred_check_branch
      %54 = sbr.rel (0) target = $region21
    $region20: #{tpu_custom_call.1} parent=1 // pred_region
      %55 = dma.done [#allocation4], 128
    $region21: #{tpu_custom_call.1} parent=1 // pred_fallthru
      _
    // Predicated region
    $region22: #{tpu_custom_call.1} parent=1 // pred_check
      _
    $region23: #{tpu_custom_call.1} parent=1 // pred_check_branch
      %57 = sbr.rel (0) target = $region25
    $region24: #{tpu_custom_call.1} parent=1 // pred_region
      %58 = dma.done [#allocation7], 128
    $region25: #{tpu_custom_call.1} parent=1 // pred_fallthru
      _
    %59 = vsyncpa [#allocation3], 1
    %60 = vsyncpa [#allocation4], 1
    %61 = vsyncpa [#allocation7], 1

</llo_original>
